<compile_context>
chip_gen: v7x
topology: tpu7x:2x2x1
jax: 0.10.0
libtpu: 0.0.40
codegen_flags: <defaults>
</compile_context>

<pallas_src>
import jax
import jax.numpy as jnp
from jax.experimental import pallas as pl
from jax.experimental.pallas import tpu as pltpu


def gate_fusion_kernel(scale_ref, w_ref, b_ref, resnet_ref, wavelet_ref, out_ref):
    # scale_ref:   SMEM (1,)        -- learnable scalar
    # w_ref:       VMEM (C, C)      -- conv weight (C_out, C_in), no transpose needed
    # b_ref:       VMEM (C, 1)      -- conv bias (broadcast over spatial lanes)
    # resnet_ref / wavelet_ref / out_ref: VMEM (C, TS) tiles (batch dim squeezed)
    x = wavelet_ref[...]                                          # (C_in, TS)
    logits = jnp.dot(w_ref[...], x, preferred_element_type=jnp.float32) + b_ref[...]
    gate = jax.nn.sigmoid(logits)                                 # (C_out, TS), f32
    r = resnet_ref[...].astype(jnp.float32)
    scale = scale_ref[0]
    # out = scale * r * gate + r  ==  r * (scale * gate + 1)
    out_ref[...] = (r * (scale * gate + 1.0)).astype(out_ref.dtype)


def gate_fusion(resnet_feat, wavelet_feat, conv_weight, conv_bias, scale, *, ts=2048):
    """resnet_feat / wavelet_feat: NCHW float32 arrays.
    conv_weight: (C_out, C_in) (from the (C_out, C_in, 1, 1) Conv2d weight).
    conv_bias:   (C,). scale: scalar.
    Returns NCHW output matching the PyTorch module.
    """
    N, C, H, W = resnet_feat.shape
    S = H * W

    # Spatial tile size: multiple of 128 (lane-dense), at most `ts`, covering S.
    ts = min(ts, pl.cdiv(S, 128) * 128)
    s_pad = pl.cdiv(S, ts) * ts

    # NCHW -> (N, C, S) is a free reshape (no data movement).
    r_ncs = resnet_feat.reshape(N, C, S)
    w_ncs = wavelet_feat.reshape(N, C, S)
    if s_pad != S:
        pad = ((0, 0), (0, 0), (0, s_pad - S))
        r_ncs = jnp.pad(r_ncs, pad)
        w_ncs = jnp.pad(w_ncs, pad)

    w_cc = jnp.asarray(conv_weight, jnp.float32)                  # (C_out, C_in)
    b = jnp.asarray(conv_bias, jnp.float32).reshape(C, 1)         # broadcast over lanes
    s = jnp.asarray(scale, jnp.float32).reshape(1)

    grid = (N, s_pad // ts)

    out_ncs = pl.pallas_call(
        gate_fusion_kernel,
        out_shape=jax.ShapeDtypeStruct((N, C, s_pad), resnet_feat.dtype),
        grid_spec=pltpu.PrefetchScalarGridSpec(
            num_scalar_prefetch=0,
            grid=grid,
            in_specs=[
                pl.BlockSpec(memory_space=pltpu.SMEM),                  # scale scalar
                pl.BlockSpec((C, C), lambda n, si: (0, 0)),             # weight (resident)
                pl.BlockSpec((C, 1), lambda n, si: (0, 0)),             # bias (resident)
                pl.BlockSpec((None, C, ts), lambda n, si: (n, 0, si)),  # resnet tile
                pl.BlockSpec((None, C, ts), lambda n, si: (n, 0, si)),  # wavelet tile
            ],
            out_specs=pl.BlockSpec((None, C, ts), lambda n, si: (n, 0, si)),
        ),
        compiler_params=pltpu.CompilerParams(
            # Both axes are independent -> shard across TensorCores (v7x megacore).
            dimension_semantics=("parallel", "parallel"),
        ),
    )(s, w_cc, b, r_ncs, w_ncs)

    if s_pad != S:
        out_ncs = out_ncs[:, :, :S]
    return out_ncs.reshape(N, C, H, W)


if __name__ == "__main__":
    key = jax.random.PRNGKey(0)
    k1, k2, k3, k4 = jax.random.split(key, 4)

    N, C, H, W = 2, 4, 16, 16

    resnet_feat = jax.random.normal(k1, (N, C, H, W), jnp.float32)
    wavelet_feat = jax.random.normal(k2, (N, C, H, W), jnp.float32)

    # Deterministic synthetic parameters (Conv2d(C, C, kernel_size=1) + scale).
    conv_weight = jax.random.normal(k3, (C, C), jnp.float32) * 0.1   # (C_out, C_in)
    conv_bias = jax.random.normal(k4, (C,), jnp.float32) * 0.1
    scale = jnp.float32(1.0)

    out = gate_fusion(resnet_feat, wavelet_feat, conv_weight, conv_bias, scale)
    out = jax.block_until_ready(out)

    # Pure-JAX reference check of the same math.
    x = jnp.transpose(wavelet_feat, (0, 2, 3, 1))                     # NHWC
    logits = jnp.einsum("nhwc,oc->nhwo", x, conv_weight) + conv_bias
    gate = jax.nn.sigmoid(jnp.transpose(logits, (0, 3, 1, 2)))        # NCHW
    ref = scale * resnet_feat * gate + resnet_feat
    assert jnp.allclose(out, ref, atol=1e-5, rtol=1e-5), "mismatch vs reference"

    print("KERNEL_OK")
</pallas_src>

<mosaic_0001>
module attributes {stable_mosaic.version = 11 : i64} {
  func.func @gate_fusion_kernel(%arg0: i32, %arg1: i32, %arg2: memref<1xf32, #tpu.memory_space<smem>>, %arg3: memref<4x4xf32, #tpu.memory_space<vmem>>, %arg4: memref<4x1xf32, #tpu.memory_space<vmem>>, %arg5: memref<1x4x256xf32, #tpu.memory_space<vmem>>, %arg6: memref<1x4x256xf32, #tpu.memory_space<vmem>>, %arg7: memref<1x4x256xf32, #tpu.memory_space<vmem>>) attributes {dimension_semantics = [#tpu.dimension_semantics<parallel>, #tpu.dimension_semantics<parallel>], iteration_bounds = array<i64: 2, 1>, scalar_prefetch = 0 : i64, scratch_operands = 0 : i64, tpu.core_type = #tpu.core_type<tc>, window_params = [{transform_indices = @transform_0, window_bounds = array<i64: 1>}, {pipeline_mode = #tpu.pipeline_mode<synchronous>, transform_indices = @transform_1, window_bounds = array<i64: 4, 4>}, {pipeline_mode = #tpu.pipeline_mode<synchronous>, transform_indices = @transform_2, window_bounds = array<i64: 4, 1>}, {transform_indices = @transform_3, window_bounds = array<i64: 1, 4, 256>}, {transform_indices = @transform_4, window_bounds = array<i64: 1, 4, 256>}, {transform_indices = @transform_5, window_bounds = array<i64: 1, 4, 256>}]} {
    %c0 = arith.constant 0 : index
    %c0_0 = arith.constant 0 : index
    %c0_1 = arith.constant 0 : index
    %0 = vector.load %arg6[%c0, %c0_0, %c0_1] : memref<1x4x256xf32, #tpu.memory_space<vmem>>, vector<1x4x256xf32>
    %1 = vector.shape_cast %0 : vector<1x4x256xf32> to vector<4x256xf32>
    %c0_2 = arith.constant 0 : index
    %c0_3 = arith.constant 0 : index
    %2 = vector.load %arg3[%c0_2, %c0_3] : memref<4x4xf32, #tpu.memory_space<vmem>>, vector<4x4xf32>
    %cst = arith.constant dense<0.000000e+00> : vector<4x256xf32>
    %3 = tpu.matmul %2, %1, %cst {dimension_numbers = #tpu.dot_dimension_numbers<[1], [0], [0], [1], [0, 0, 1, 1], [], []>} : vector<4x4xf32>, vector<4x256xf32>, vector<4x256xf32> -> vector<4x256xf32>
    %c0_4 = arith.constant 0 : index
    %c0_5 = arith.constant 0 : index
    %4 = vector.load %arg4[%c0_4, %c0_5] : memref<4x1xf32, #tpu.memory_space<vmem>>, vector<4x1xf32>
    %5 = vector.broadcast %4 : vector<4x1xf32> to vector<4x256xf32>
    %6 = arith.addf %3, %5 : vector<4x256xf32>
    %7 = arith.negf %6 : vector<4x256xf32>
    %8 = math.exp %7 : vector<4x256xf32>
    %cst_6 = arith.constant 1.000000e+00 : f32
    %9 = vector.broadcast %cst_6 : f32 to vector<4x256xf32>
    %10 = arith.addf %9, %8 : vector<4x256xf32>
    %11 = arith.divf %9, %10 : vector<4x256xf32>
    %c0_7 = arith.constant 0 : index
    %c0_8 = arith.constant 0 : index
    %c0_9 = arith.constant 0 : index
    %12 = vector.load %arg5[%c0_7, %c0_8, %c0_9] : memref<1x4x256xf32, #tpu.memory_space<vmem>>, vector<1x4x256xf32>
    %13 = vector.shape_cast %12 : vector<1x4x256xf32> to vector<4x256xf32>
    %c0_10 = arith.constant 0 : index
    %14 = memref.load %arg2[%c0_10] : memref<1xf32, #tpu.memory_space<smem>>
    %15 = vector.broadcast %14 : f32 to vector<4x256xf32>
    %16 = arith.mulf %15, %11 : vector<4x256xf32>
    %cst_11 = arith.constant 1.000000e+00 : f32
    %17 = vector.broadcast %cst_11 : f32 to vector<4x256xf32>
    %18 = arith.addf %16, %17 : vector<4x256xf32>
    %19 = arith.mulf %13, %18 : vector<4x256xf32>
    %c0_12 = arith.constant 0 : index
    %c0_13 = arith.constant 0 : index
    %c0_14 = arith.constant 0 : index
    %20 = vector.load %arg7[%c0_12, %c0_13, %c0_14] : memref<1x4x256xf32, #tpu.memory_space<vmem>>, vector<1x4x256xf32>
    %21 = vector.shape_cast %20 : vector<1x4x256xf32> to vector<4x256xf32>
    %22 = vector.shape_cast %19 : vector<4x256xf32> to vector<1x4x256xf32>
    tpu.vector_store %arg7[%c0_12, %c0_13, %c0_14], %22 {strides = array<i32>} : memref<1x4x256xf32, #tpu.memory_space<vmem>>, vector<1x4x256xf32>,
    return
  }
  func.func @transform_0(%arg0: i32, %arg1: i32) -> i32 {
    %c0_i32 = arith.constant 0 : i32
    %c0_i32_0 = arith.constant 0 : i32
    return %c0_i32 : i32
  }
  func.func @transform_1(%arg0: i32, %arg1: i32) -> (i32, i32) {
    %c0_i32 = arith.constant 0 : i32
    %c0_i32_0 = arith.constant 0 : i32
    %c0_i32_1 = arith.constant 0 : i32
    return %c0_i32, %c0_i32_0 : i32, i32
  }
  func.func @transform_2(%arg0: i32, %arg1: i32) -> (i32, i32) {
    %c0_i32 = arith.constant 0 : i32
    %c0_i32_0 = arith.constant 0 : i32
    %c0_i32_1 = arith.constant 0 : i32
    return %c0_i32, %c0_i32_0 : i32, i32
  }
  func.func @transform_3(%arg0: i32, %arg1: i32) -> (i32, i32, i32) {
    %c0_i32 = arith.constant 0 : i32
    %c0_i32_0 = arith.constant 0 : i32
    return %arg0, %c0_i32, %arg1 : i32, i32, i32
  }
  func.func @transform_4(%arg0: i32, %arg1: i32) -> (i32, i32, i32) {
    %c0_i32 = arith.constant 0 : i32
    %c0_i32_0 = arith.constant 0 : i32
    return %arg0, %c0_i32, %arg1 : i32, i32, i32
  }
  func.func @transform_5(%arg0: i32, %arg1: i32) -> (i32, i32, i32) {
    %c0_i32 = arith.constant 0 : i32
    %c0_i32_0 = arith.constant 0 : i32
    return %arg0, %c0_i32, %arg1 : i32, i32, i32
  }
}

</mosaic_0001>

<llo_original>
// kernel: tpu_custom_call.1
$region0: #{tpu_custom_call.1}
  #allocation0 [shape = 'u32[]', space=smem, size = 0x4, offset = 0x4, fixed_abs, tag = 'smem constant byte address 0x4 - core index']
  #allocation1 [shape = 'u32[144,128]{1,0:T(1,128)}', space=vmem, size = 0x12000, scoped, tag = 'internal scratch']
  #allocation2 [shape = 'f32[1]{0:T(128)S(6)}', space=smem, size = 0x200, scoped, tag = 'scoped memory for tpu_custom_call.1']
  %s0 = inlined_call_operand.<no memory space> [shape: f32[1], index: 0, kind: input, shape index: {}]
  %s1 = inlined_call_operand.hbm [shape: f32[4,4], index: 1, kind: input, shape index: {}]
  %s2 = inlined_call_operand.vmem [shape: f32[4,1], index: 2, kind: input, shape index: {}]
  %s3 = inlined_call_operand.vmem [shape: f32[2,4,256], index: 3, kind: input, shape index: {}]
  %s4 = inlined_call_operand.hbm [shape: f32[2,4,256], index: 4, kind: input, shape index: {}]
  %s5 = inlined_call_operand.hbm [shape: f32[2,4,256], index: 5, kind: output, shape index: {}]
  %s6 = sld [smem:[#allocation0]]
  $region61: #{tpu_custom_call.1} parent=0
    _
  %s8 = ssub.s32 1, %s6
  %s9 = scalar_select 0, %s8, %s6
  %10 = sst [smem:[#allocation2]] %s0
  $region1: #{tpu_custom_call.1} parent=0
    #allocation3 [shape = 'u8[2048]{0}', space=vmem, size = 0x800, scoped, tag = 'input window, operand 1, single buffered']
    #allocation4 [shape = 's32[2]{0}', space=sflag, size = 0x8, scoped, tag = 'scoped memory for tpu_custom_call.1']
    #allocation5 [shape = 's32[2]{0}', space=sflag, size = 0x8, scoped, tag = 'scoped memory for tpu_custom_call.1']
    #allocation6 [shape = 'u8[8192]{0}', space=vmem, size = 0x2000, scoped, tag = 'input window, operand 4']
    #allocation7 [shape = 's32[2]{0}', space=sflag, size = 0x8, scoped, tag = 'scoped memory for tpu_custom_call.1']
    #allocation8 [shape = 'u8[8192]{0}', space=vmem, size = 0x2000, scoped, tag = 'output window, operand 0']
    %11 = vsyncpa [#allocation4], 0
    %12 = vsyncpa [#allocation7], 0
    %s13 = scalar_lea.sflag [#allocation7], 1
    %14 = vsyncpa %s13, 0
    %15 = vsyncpa [#allocation5], 0
    %s16 = scalar_lea.sflag [#allocation5], 1
    %17 = vsyncpa %s16, 0
    loop: start=0, step=1, limit=4
    $region2: #{tpu_custom_call.1} parent=1 // loop_pre_header
      _
    $region3: #{tpu_custom_call.1} parent=1 // loop_header
      %s19 = sphi 0, %s23
      %p20 = scmp.ge.s32.totalorder %s19, 4
      %s26 = sphi 0, %s38
      %s27 = sphi 0, %s34
      %s28 = sphi 0, %s26
      %s29 = sphi 0, %s27
      %s30 = sphi 0, %s28
      %s31 = sphi 0, %s29
      %s39 = sphi 0, %s39
      %s41 = sphi 0, %s39
      %s42 = sphi 0, %s41
      %s56 = sphi 0, %s42
      %s60 = sphi 0, %s60
      %s62 = sphi 0, %s60
      %s63 = sphi 0, %s62
      %s77 = sphi 0, %s63
      %s81 = sphi 0, %s81
      %s83 = sphi 0, %s81
      %s84 = sphi 0, %s83
      %s98 = sphi 0, %s84
      %s106 = sphi 0, %s108
      %s109 = sphi 0, %s106
      %s110 = sphi 0, %s109
      %s126 = sphi 0, %s110
      %s134 = sphi 0, %s136
      %s137 = sphi 0, %s134
      %s138 = sphi 0, %s137
      %s154 = sphi 0, %s138
      %s162 = sphi 0, %s164
      %s165 = sphi 0, %s162
      %s166 = sphi 0, %s165
      %s182 = sphi 0, %s166
    $region4: #{tpu_custom_call.1} parent=1 // loop_header_branch
      %22 = sbr.rel (%p20) target = $region8
    $region5: #{tpu_custom_call.1} parent=1 // loop_body
      %s24 = ssub.s32 %s19, 1
      %s25 = ssub.s32 %s19, 2
      %s32 = sadd.s32 1, %s27
      %p33 = scmp.ge.s32.totalorder %s32, 1
      %s34 = scalar_select %p33, 0, %s32
      %s35 = sadd.s32 1, %s26
      %s36 = scalar_select %p33, %s35, %s26
      %p37 = scmp.ge.s32.totalorder %s36, 2
      %s38 = scalar_select %p37, 0, %s36
      %s40 = sadd.s32 %s39, 1
      %p43 = scmp.eq.s32.totalorder %s19, 1
      %p44 = scmp.ne.s32.totalorder %s39, %s41
      %p45 = scmp.eq.s32.totalorder %s19, 0
      %p46 = por %p44, %p45
      %p47 = scmp.ne.s32.totalorder %s39, %s41
      %p48 = scmp.eq.s32.totalorder %s24, 1
      %p49 = por %p47, %p48
      %p50 = scmp.ne.s32.totalorder %s41, %s42
      %p51 = scmp.eq.s32.totalorder %s24, 0
      %p52 = por %p50, %p51
      %p53 = scmp.ne.s32.totalorder %s41, %s42
      %p54 = scmp.eq.s32.totalorder %s25, 1
      %p55 = por %p53, %p54
      %p57 = scmp.ne.s32.totalorder %s42, %s56
      %p58 = scmp.eq.s32.totalorder %s25, 0
      %p59 = por %p57, %p58
      %s61 = sadd.s32 %s60, 1
      %p64 = scmp.eq.s32.totalorder %s19, 1
      %p65 = scmp.ne.s32.totalorder %s60, %s62
      %p66 = scmp.eq.s32.totalorder %s19, 0
      %p67 = por %p65, %p66
      %p68 = scmp.ne.s32.totalorder %s60, %s62
      %p69 = scmp.eq.s32.totalorder %s24, 1
      %p70 = por %p68, %p69
      %p71 = scmp.ne.s32.totalorder %s62, %s63
      %p72 = scmp.eq.s32.totalorder %s24, 0
      %p73 = por %p71, %p72
      %p74 = scmp.ne.s32.totalorder %s62, %s63
      %p75 = scmp.eq.s32.totalorder %s25, 1
      %p76 = por %p74, %p75
      %p78 = scmp.ne.s32.totalorder %s63, %s77
      %p79 = scmp.eq.s32.totalorder %s25, 0
      %p80 = por %p78, %p79
      %s82 = sadd.s32 %s81, 1
      %p85 = scmp.eq.s32.totalorder %s19, 1
      %p86 = scmp.ne.s32.totalorder %s81, %s83
      %p87 = scmp.eq.s32.totalorder %s19, 0
      %p88 = por %p86, %p87
      %p89 = scmp.ne.s32.totalorder %s81, %s83
      %p90 = scmp.eq.s32.totalorder %s24, 1
      %p91 = por %p89, %p90
      %p92 = scmp.ne.s32.totalorder %s83, %s84
      %p93 = scmp.eq.s32.totalorder %s24, 0
      %p94 = por %p92, %p93
      %p95 = scmp.ne.s32.totalorder %s83, %s84
      %p96 = scmp.eq.s32.totalorder %s25, 1
      %p97 = por %p95, %p96
      %p99 = scmp.ne.s32.totalorder %s84, %s98
      %p100 = scmp.eq.s32.totalorder %s25, 0
      %p101 = por %p99, %p100
      %s102 = ssub.s32 %s26, %s38
      %s103 = ssub.s32 %s27, %s34
      %s104 = sor.u32 %s102, %s103
      %p105 = scmp.eq.s32.totalorder %s104, 0
      %s107 = sadd.s32 %s106, 1
      %s108 = scalar_select %p105, %s106, %s107
      %p111 = pneg %p105
      %p112 = scmp.eq.s32.totalorder %s19, 1
      %p113 = por %p111, %p112
      %p114 = scmp.ne.s32.totalorder %s106, %s109
      %p115 = scmp.eq.s32.totalorder %s19, 0
      %p116 = por %p114, %p115
      %p117 = scmp.ne.s32.totalorder %s106, %s109
      %p118 = scmp.eq.s32.totalorder %s24, 1
      %p119 = por %p117, %p118
      %p120 = scmp.ne.s32.totalorder %s109, %s110
      %p121 = scmp.eq.s32.totalorder %s24, 0
      %p122 = por %p120, %p121
      %p123 = scmp.ne.s32.totalorder %s109, %s110
      %p124 = scmp.eq.s32.totalorder %s25, 1
      %p125 = por %p123, %p124
      %p127 = scmp.ne.s32.totalorder %s110, %s126
      %p128 = scmp.eq.s32.totalorder %s25, 0
      %p129 = por %p127, %p128
      %s130 = ssub.s32 %s26, %s38
      %s131 = ssub.s32 %s27, %s34
      %s132 = sor.u32 %s130, %s131
      %p133 = scmp.eq.s32.totalorder %s132, 0
      %s135 = sadd.s32 %s134, 1
      %s136 = scalar_select %p133, %s134, %s135
      %p139 = pneg %p133
      %p140 = scmp.eq.s32.totalorder %s19, 1
      %p141 = por %p139, %p140
      %p142 = scmp.ne.s32.totalorder %s134, %s137
      %p143 = scmp.eq.s32.totalorder %s19, 0
      %p144 = por %p142, %p143
      %p145 = scmp.ne.s32.totalorder %s134, %s137
      %p146 = scmp.eq.s32.totalorder %s24, 1
      %p147 = por %p145, %p146
      %p148 = scmp.ne.s32.totalorder %s137, %s138
      %p149 = scmp.eq.s32.totalorder %s24, 0
      %p150 = por %p148, %p149
      %p151 = scmp.ne.s32.totalorder %s137, %s138
      %p152 = scmp.eq.s32.totalorder %s25, 1
      %p153 = por %p151, %p152
      %p155 = scmp.ne.s32.totalorder %s138, %s154
      %p156 = scmp.eq.s32.totalorder %s25, 0
      %p157 = por %p155, %p156
      %s158 = ssub.s32 %s26, %s38
      %s159 = ssub.s32 %s27, %s34
      %s160 = sor.u32 %s158, %s159
      %p161 = scmp.eq.s32.totalorder %s160, 0
      %s163 = sadd.s32 %s162, 1
      %s164 = scalar_select %p161, %s162, %s163
      %p167 = pneg %p161
      %p168 = scmp.eq.s32.totalorder %s19, 1
      %p169 = por %p167, %p168
      %p170 = scmp.ne.s32.totalorder %s162, %s165
      %p171 = scmp.eq.s32.totalorder %s19, 0
      %p172 = por %p170, %p171
      %p173 = scmp.ne.s32.totalorder %s162, %s165
      %p174 = scmp.eq.s32.totalorder %s24, 1
      %p175 = por %p173, %p174
      %p176 = scmp.ne.s32.totalorder %s165, %s166
      %p177 = scmp.eq.s32.totalorder %s24, 0
      %p178 = por %p176, %p177
      %p179 = scmp.ne.s32.totalorder %s165, %s166
      %p180 = scmp.eq.s32.totalorder %s25, 1
      %p181 = por %p179, %p180
      %p183 = scmp.ne.s32.totalorder %s166, %s182
      %p184 = scmp.eq.s32.totalorder %s25, 0
      %p185 = por %p183, %p184
      %p186 = scmp.le.s32.totalorder 1, %s19
      %p187 = scmp.lt.s32.totalorder %s19, 3
      %p188 = pnand %p186, %p187
      %p189 = pneg %p188
      // Predicated region
      $region9: #{tpu_custom_call.1} parent=5 // pred_check
        _
      $region10: #{tpu_custom_call.1} parent=5 // pred_check_branch
        %191 = sbr.rel (%p188) target = $region12
      $region11: #{tpu_custom_call.1} parent=5 // pred_region
        %s192 = ssub.s32 %s19, 1
        // Predicated region
        $region13: #{tpu_custom_call.1} parent=11 // pred_check
          %p193 = pneg %p52
        $region14: #{tpu_custom_call.1} parent=11 // pred_check_branch
          %195 = sbr.rel (%p193) target = $region16
        $region15: #{tpu_custom_call.1} parent=11 // pred_region
          _
        $region16: #{tpu_custom_call.1} parent=11 // pred_fallthru
          _
        // Predicated region
        $region17: #{tpu_custom_call.1} parent=11 // pred_check
          %p196 = pneg %p73
        $region18: #{tpu_custom_call.1} parent=11 // pred_check_branch
          %198 = sbr.rel (%p196) target = $region20
        $region19: #{tpu_custom_call.1} parent=11 // pred_region
          %s200 = ssub.s32 64, 64
          %201 = vsyncadd [#allocation4], %s200
          %s203 = sshll.u32 [#allocation3], 4
          %s204 = int_to_ptr.vmem [resolvable:$true] %s203
          %206 = dma.hbm_to_vmem [thread:$0]  %s1, 64, %s204, [#allocation4]
        $region20: #{tpu_custom_call.1} parent=11 // pred_fallthru
          _
        // Predicated region
        $region21: #{tpu_custom_call.1} parent=11 // pred_check
          %p207 = pneg %p94
        $region22: #{tpu_custom_call.1} parent=11 // pred_check_branch
          %209 = sbr.rel (%p207) target = $region24
        $region23: #{tpu_custom_call.1} parent=11 // pred_region
          _
        $region24: #{tpu_custom_call.1} parent=11 // pred_fallthru
          _
      $region12: #{tpu_custom_call.1} parent=5 // pred_fallthru
        _
      %p210 = scmp.lt.s32.totalorder %s19, 2
      // Predicated region
      $region25: #{tpu_custom_call.1} parent=5 // pred_check
        %p211 = pneg %p210
      $region26: #{tpu_custom_call.1} parent=5 // pred_check_branch
        %213 = sbr.rel (%p211) target = $region28
      $region27: #{tpu_custom_call.1} parent=5 // pred_region
        // Predicated region
        $region29: #{tpu_custom_call.1} parent=27 // pred_check
          %p214 = pneg %p116
        $region30: #{tpu_custom_call.1} parent=27 // pred_check_branch
          %216 = sbr.rel (%p214) target = $region32
        $region31: #{tpu_custom_call.1} parent=27 // pred_region
          %s217 = smul.u32 2, %s27
          %p218 = scmp.lt.s32.totalorder %s26, 1
          %s219 = scalar_select %p218, %s26, 1
          %p220 = scmp.lt.s32.totalorder %s217, 1
          %s221 = scalar_select %p220, %s217, 1
          %s222 = smul.addr %s219, 2
          %s223 = sadd.s32 %s221, %s222
          %s224 = smul.addr %s223, 4
          %s225 = scalar_lea.vmem %s3, %s224
          %s226 = smul.u32 2, %s27
        $region32: #{tpu_custom_call.1} parent=27 // pred_fallthru
          _
        // Predicated region
        $region33: #{tpu_custom_call.1} parent=27 // pred_check
          %p227 = pneg %p144
        $region34: #{tpu_custom_call.1} parent=27 // pred_check_branch
          %229 = sbr.rel (%p227) target = $region36
        $region35: #{tpu_custom_call.1} parent=27 // pred_region
          %s230 = sand.u32 %s134, 1
          %s231 = scalar_lea.sflag [#allocation7], %s230
          %s232 = sand.u32 %s134, 1
          %s233 = smul.addr %s232, 8
          %s234 = scalar_lea.vmem [#allocation6], %s233
          %s235 = smul.u32 2, %s27
          %s237 = ssub.s32 128, 128
          %238 = vsyncadd %s231, %s237
          %s239 = smul.addr %s26, 2
          %s240 = sadd.s32 %s235, %s239
          %s241 = smul.addr %s240, 64
          %s242 = scalar_lea.hbm %s4, %s241
          %s244 = sshll.u32 %s234, 4
          %s245 = int_to_ptr.vmem [resolvable:$true] %s244
          %247 = dma.hbm_to_vmem [thread:$0]  %s242, 128, %s245, %s231
        $region36: #{tpu_custom_call.1} parent=27 // pred_fallthru
          _
      $region28: #{tpu_custom_call.1} parent=5 // pred_fallthru
        _
      %p248 = scmp.le.s32.totalorder 1, %s19
      %p249 = scmp.lt.s32.totalorder %s19, 3
      %p250 = pnand %p248, %p249
      %p251 = pneg %p250
      // Predicated region
      $region37: #{tpu_custom_call.1} parent=5 // pred_check
        _
      $region38: #{tpu_custom_call.1} parent=5 // pred_check_branch
        %253 = sbr.rel (%p250) target = $region40
      $region39: #{tpu_custom_call.1} parent=5 // pred_region
        %s254 = ssub.s32 %s19, 1
        // Predicated region
        $region41: #{tpu_custom_call.1} parent=39 // pred_check
          %p255 = pneg %p73
        $region42: #{tpu_custom_call.1} parent=39 // pred_check_branch
          %257 = sbr.rel (%p255) target = $region44
        $region43: #{tpu_custom_call.1} parent=39 // pred_region
          %258 = dma.done [#allocation4], 64
        $region44: #{tpu_custom_call.1} parent=39 // pred_fallthru
          _
        %s259 = sand.u32 %s137, 1
        %s260 = scalar_lea.sflag [#allocation7], %s259
        %s261 = sand.u32 %s137, 1
        %s262 = smul.addr %s261, 8
        %s263 = scalar_lea.vmem [#allocation6], %s262
        // Predicated region
        $region45: #{tpu_custom_call.1} parent=39 // pred_check
          %p264 = pneg %p150
        $region46: #{tpu_custom_call.1} parent=39 // pred_check_branch
          %266 = sbr.rel (%p264) target = $region48
        $region47: #{tpu_custom_call.1} parent=39 // pred_region
          %267 = dma.done %s260, 128
        $region48: #{tpu_custom_call.1} parent=39 // pred_fallthru
          _
        %p268 = pneg %p52
        %p269 = pneg %p49
        %p270 = pneg %p73
        %p271 = pneg %p70
        %p272 = pneg %p94
        %p273 = pneg %p91
        %s274 = smul.u32 2, %s29
        %p275 = scmp.lt.s32.totalorder %s28, 1
        %s276 = scalar_select %p275, %s28, 1
        %p277 = scmp.lt.s32.totalorder %s274, 1
        %s278 = scalar_select %p277, %s274, 1
        %s279 = smul.addr %s276, 2
        %s280 = sadd.s32 %s278, %s279
        %s281 = smul.addr %s280, 4
        %s282 = scalar_lea.vmem %s3, %s281
        %p283 = pneg %p122
        %p284 = pneg %p119
        %s285 = sand.u32 %s137, 1
        %s286 = scalar_lea.sflag [#allocation7], %s285
        %s287 = sand.u32 %s137, 1
        %s288 = smul.addr %s287, 8
        %s289 = scalar_lea.vmem [#allocation6], %s288
        %p290 = pneg %p150
        %p291 = pneg %p147
        %p292 = pneg %p178
        %p293 = pneg %p175
        %s294 = sand.u32 %s165, 1
        %s295 = scalar_lea.sflag [#allocation5], %s294
        %s296 = sand.u32 %s165, 1
        %s297 = smul.addr %s296, 8
        %s298 = scalar_lea.vmem [#allocation8], %s297
        %s299 = smul.u32 2, %s29
        %p300 = scmp.lt.s32.totalorder %s28, 1
        %s301 = scalar_select %p300, %s28, 1
        %p302 = scmp.lt.s32.totalorder %s299, 1
        %s303 = scalar_select %p302, %s299, 1
        %s304 = smul.addr %s301, 2
        %s305 = sadd.s32 %s303, %s304
        %s306 = smul.addr %s305, 4
        %s307 = scalar_lea.vmem %s3, %s306
        %s308 = smul.u32 2, %s29
        %s309 = smul.u32 2, %s29
        %s310 = smul.u32 2, %s29
        %v311 = vld [vmem:[%s263] sm:$0xff]
        %v312 = vld [vmem:[#allocation3] sm:$0xf]
        %v313 = vld [vmem:[%s2] sm:$0xf]
        %315 = vset.pattern.permute.xlu0 0
        %316 = vperm.xlu0 %315, %v313
        %v317 = vpop.permute.xlu0 %316
        %v320 = vcombine.high %v311, %v311
        %vm321 = vcmask 31744
        %v323 = vsel %vm321, %v312, 0
        %vm325 = vcmask 1043456
        %v326 = vsel %vm325, %v311, 0
        %v328 = vsel %vm325, %v320, 0
        %330 = vmatprep.subr.mxu0 %v328
        %331 = vmatpush1.msra.mxu0 %v326
        %332 = vmatprep.subr.mxu0 0.0
        %333 = vmatpush1.msra.mxu0 0.0
        %334 = vmatprep.subr.mxu0 0.0
        %335 = vmatpush1.msra.mxu0 0.0
        %336 = vmatprep.subr.mxu0 0.0
        %337 = vmatpush1.msra.mxu0 0.0
        %338 = vmatprep.subr.mxu0 0.0
        %339 = vmatpush1.msra.mxu0 0.0
        %340 = vmatprep.subr.mxu0 0.0
        %341 = vmatpush1.msra.mxu0 0.0
        %342 = vmatprep.subr.mxu0 0.0
        %343 = vmatpush1.msra.mxu0 0.0
        %344 = vmatprep.subr.mxu0 0.0
        %345 = vmatpush1.msra.mxu0 0.0
        %346 = vmatprep.subr.mxu0 0.0
        %347 = vmatpush1.msra.mxu0 0.0
        %348 = vmatprep.subr.mxu0 0.0
        %349 = vmatpush1.msra.mxu0 0.0
        %350 = vmatprep.subr.mxu0 0.0
        %351 = vmatpush1.msra.mxu0 0.0
        %352 = vmatprep.subr.mxu0 0.0
        %353 = vmatpush1.msra.mxu0 0.0
        %354 = vmatprep.subr.mxu0 0.0
        %355 = vmatpush1.msra.mxu0 0.0
        %356 = vmatprep.subr.mxu0 0.0
        %357 = vmatpush1.msra.mxu0 0.0
        %358 = vmatprep.subr.mxu0 0.0
        %359 = vmatpush1.msra.mxu0 0.0
        %360 = vmatprep.subr.mxu0 0.0
        %361 = vmatpush1.msra.mxu0 0.0
        %362 = vmatprep.subr.mxu0 0.0
        %363 = vmatpush1.msra.mxu0 0.0
        %364 = vmatprep.subr.mxu0 0.0
        %365 = vmatpush1.msra.mxu0 0.0
        %366 = vmatprep.subr.mxu0 0.0
        %367 = vmatpush1.msra.mxu0 0.0
        %368 = vmatprep.subr.mxu0 0.0
        %369 = vmatpush1.msra.mxu0 0.0
        %370 = vmatprep.subr.mxu0 0.0
        %371 = vmatpush1.msra.mxu0 0.0
        %372 = vmatprep.subr.mxu0 0.0
        %373 = vmatpush1.msra.mxu0 0.0
        %374 = vmatprep.subr.mxu0 0.0
        %375 = vmatpush1.msra.mxu0 0.0
        %376 = vmatprep.subr.mxu0 0.0
        %377 = vmatpush1.msra.mxu0 0.0
        %378 = vmatprep.subr.mxu0 0.0
        %379 = vmatpush1.msra.mxu0 0.0
        %380 = vmatprep.subr.mxu0 0.0
        %381 = vmatpush1.msra.mxu0 0.0
        %382 = vmatprep.subr.mxu0 0.0
        %383 = vmatpush1.msra.mxu0 0.0
        %384 = vmatprep.subr.mxu0 0.0
        %385 = vmatpush1.msra.mxu0 0.0
        %386 = vmatprep.subr.mxu0 0.0
        %387 = vmatpush1.msra.mxu0 0.0
        %388 = vmatprep.subr.mxu0 0.0
        %389 = vmatpush1.msra.mxu0 0.0
        %390 = vmatprep.subr.mxu0 0.0
        %391 = vmatpush1.msra.mxu0 0.0
        %392 = vmatprep.subr.mxu0 0.0
        %393 = vmatpush1.msra.mxu0 0.0
        %394 = vmatprep.mubr.f32.mxu0 0.0
        %395 = vmatmul.mubr.f32.gmra.mrb[0].mxu0 %v323
        %v396 = vpop.f32.mrb[0].mxu0
        %v397 = vadd.f32 %v317, %v396
        %v398 = vpop.f32.mrb[0].mxu0
        %v399 = vadd.f32 %v317, %v398
        %400 = vdwg.mxu0
        %v401 = vxor.u32 %v397, 2147483648
        %v402 = vxor.u32 %v399, 2147483648
        %v403 = vmul.f32 %v401, 1.442695
        %v404 = vpow.pop %v403
        %v405 = vmul.f32 %v402, 1.442695
        %v406 = vpow.pop %v405
        %v407 = vadd.f32 %v404, 1.0
        %v408 = vadd.f32 %v406, 1.0
        %v409 = vrcp.pop %v407
        %v410 = vmul.f32 1.0, %v409
        %v411 = vrcp.pop %v408
        %v412 = vmul.f32 1.0, %v411
        %v413 = vld [vmem:[%s307] sm:$0xff]
        %s414 = sld [smem:[#allocation2]]
        %v415 = vstv %s414
        %v416 = vmul.f32 %v415, %v410
        %v417 = vmul.f32 %v415, %v412
        %v418 = vadd.f32 %v416, 1.0
        %v419 = vadd.f32 %v417, 1.0
        %v422 = vcombine.low %v418, %v419
        %v424 = vmul.f32 %v413, %v422
        %425 = vst [vmem:[%s298] sm:$0xff] %v424
        %s426 = sand.u32 %s165, 1
        %s427 = scalar_lea.sflag [#allocation5], %s426
        %s428 = sand.u32 %s165, 1
        %s429 = smul.addr %s428, 8
        %s430 = scalar_lea.vmem [#allocation8], %s429
        // Predicated region
        $region49: #{tpu_custom_call.1} parent=39 // pred_check
          %p431 = pneg %p175
        $region50: #{tpu_custom_call.1} parent=39 // pred_check_branch
          %433 = sbr.rel (%p431) target = $region52
        $region51: #{tpu_custom_call.1} parent=39 // pred_region
          %s434 = smul.u32 2, %s29
          %s436 = ssub.s32 128, 128
          %437 = vsyncadd %s427, %s436
          %s438 = smul.addr %s28, 2
          %s439 = sadd.s32 %s434, %s438
          %s440 = smul.addr %s439, 64
          %s441 = scalar_lea.hbm %s5, %s440
          %s443 = sshll.u32 %s430, 4
          %s444 = int_to_ptr.vmem [resolvable:$true] %s443
          %446 = dma.vmem_to_hbm [thread:$0]  %s444, 128, %s441, %s427
        $region52: #{tpu_custom_call.1} parent=39 // pred_fallthru
          _
      $region40: #{tpu_custom_call.1} parent=5 // pred_fallthru
        _
      %p447 = scmp.le.s32.totalorder 2, %s19
      // Predicated region
      $region53: #{tpu_custom_call.1} parent=5 // pred_check
        %p448 = pneg %p447
      $region54: #{tpu_custom_call.1} parent=5 // pred_check_branch
        %450 = sbr.rel (%p448) target = $region56
      $region55: #{tpu_custom_call.1} parent=5 // pred_region
        %s451 = ssub.s32 %s19, 2
        // Predicated region
        $region57: #{tpu_custom_call.1} parent=55 // pred_check
          %p452 = pneg %p181
        $region58: #{tpu_custom_call.1} parent=55 // pred_check_branch
          %454 = sbr.rel (%p452) target = $region60
        $region59: #{tpu_custom_call.1} parent=55 // pred_region
          %s455 = sand.u32 %s166, 1
          %s456 = scalar_lea.sflag [#allocation5], %s455
          %s457 = sand.u32 %s166, 1
          %s458 = smul.addr %s457, 8
          %s459 = scalar_lea.vmem [#allocation8], %s458
          %460 = dma.done %s456, 128
        $region60: #{tpu_custom_call.1} parent=55 // pred_fallthru
          _
      $region56: #{tpu_custom_call.1} parent=5 // pred_fallthru
        _
    $region6: #{tpu_custom_call.1} parent=1 // loop_footer
      %s23 = sadd.s32 1, %s19
    $region7: #{tpu_custom_call.1} parent=1 // loop_footer_branch
      %18 = sbr.rel target = $region3
    $region8: #{tpu_custom_call.1} parent=1 // loop_exit
      _
    %461 = vsyncpa [#allocation4], 1
    %s462 = scalar_lea.sflag [#allocation4], 1
    %463 = vsyncpa %s462, 1
    %464 = vsyncpa [#allocation7], 1
    %s465 = scalar_lea.sflag [#allocation7], 1
    %466 = vsyncpa %s465, 1
    %467 = vsyncpa [#allocation5], 1
    %s468 = scalar_lea.sflag [#allocation5], 1
    %469 = vsyncpa %s468, 1

</llo_original>
